<compile_context>
chip_gen: v6e
topology: v6e:2x2x1
jax: 0.10.0
libtpu: 0.0.40
codegen_flags: <defaults>
</compile_context>

<pallas_src>
import math

import jax
import jax.numpy as jnp
from jax.experimental import pallas as pl
from jax.experimental.pallas import tpu as pltpu


def _gelu_exact(z):
    # Matches torch.nn.GELU() default (approximate='none'): 0.5*z*(1+erf(z/sqrt(2)))
    return 0.5 * z * (1.0 + jax.lax.erf(z * (1.0 / math.sqrt(2.0))))


def _gelu_tanh(z):
    # torch.nn.GELU(approximate='tanh'): tanh goes to the EUP slot -> VALU relief.
    c = math.sqrt(2.0 / math.pi)
    return 0.5 * z * (1.0 + jnp.tanh(c * (z + 0.044715 * (z * z * z))))


def _make_mlp_kernel(num_layers, gelu_fn):
    """Kernel body: x tile in, (W, b) pairs resident in VMEM, fused matmul+GELU."""

    def kernel(x_ref, *refs):
        o_ref = refs[-1]
        wb_refs = refs[:-1]
        # h kept in f32; only the MXU operands are bf16 (f32 accumulate).
        h = x_ref[...].astype(jnp.float32)
        for l in range(num_layers):
            w_ref = wb_refs[2 * l]
            b_ref = wb_refs[2 * l + 1]
            z = jnp.dot(h.astype(w_ref.dtype), w_ref[...],
                        preferred_element_type=jnp.float32)
            z = z + b_ref[...]            # bias is f32, broadcasts over rows
            h = gelu_fn(z)
        o_ref[...] = h.astype(o_ref.dtype)

    return kernel


def mlp_forward(x, params, *, tm=512, weight_dtype=jnp.bfloat16, gelu_approx="tanh"):
    """x: (B, D).  params: list of (W(in,out), b(1,out)) f32 tuples.

    Weights are stored pre-transposed as (in_dim, out_dim) so the kernel computes
    h @ W + b (equivalent to PyTorch's x @ W_t.T + b).
    gelu_approx: "tanh" (fast, EUP-routed) or "none" (exact torch semantics).
    """
    B, D = x.shape
    out_dim = params[-1][0].shape[1]
    gelu_fn = _gelu_tanh if gelu_approx == "tanh" else _gelu_exact

    # Sublane minimum for the activation dtype (f32 -> 8 rows, bf16 -> 16).
    min_rows = 16 if x.dtype == jnp.dtype(jnp.bfloat16) else 8

    # Batch tile: large enough to amortize the ~0.35 us/step grid overhead, but
    # ensure >= 2 batch tiles whenever B allows so the "parallel" axis can be
    # split across v7x's two TensorCores.
    tm = max(1, min(tm, B))
    if B >= 2 * min_rows and pl.cdiv(B, tm) < 2:
        tm = ((pl.cdiv(B, 2) + min_rows - 1) // min_rows) * min_rows
    grid = (pl.cdiv(B, tm),)

    flat = []
    in_specs = [pl.BlockSpec((tm, D), lambda i: (i, 0))]
    for w, b in params:
        flat.append(w.astype(weight_dtype))   # bf16 weights -> half the DMA, 2x MXU
        flat.append(b.astype(jnp.float32))    # biases stay f32 (tiny)
        # Constant block index -> loaded once, resident in VMEM for all grid steps.
        in_specs.append(pl.BlockSpec(w.shape, lambda i: (0, 0)))
        in_specs.append(pl.BlockSpec(b.shape, lambda i: (0, 0)))

    itemsize_w = jnp.dtype(weight_dtype).itemsize
    flops = sum(2 * B * w.shape[0] * w.shape[1] for w, _ in params)
    transcendentals = sum(B * w.shape[1] for w, _ in params)  # one erf/tanh per output elem
    bytes_accessed = (x.size * x.dtype.itemsize
                      + B * out_dim * x.dtype.itemsize
                      + sum(w.size * itemsize_w + b.size * 4 for w, b in params))

    kernel = _make_mlp_kernel(len(params), gelu_fn)
    return pl.pallas_call(
        kernel,
        out_shape=jax.ShapeDtypeStruct((B, out_dim), x.dtype),
        grid=grid,
        in_specs=in_specs,
        out_specs=pl.BlockSpec((tm, out_dim), lambda i: (i, 0)),
        compiler_params=pltpu.CompilerParams(
            dimension_semantics=("parallel",),     # batch tiles shard across TCs (v7x)
            vmem_limit_bytes=32 * 1024 * 1024,     # footprint ~5 MB, never binding
        ),
        cost_estimate=pl.CostEstimate(
            flops=flops,
            transcendentals=transcendentals,
            bytes_accessed=bytes_accessed,
        ),
    )(x, *flat)


def init_params(key, layers, dims):
    """Deterministic uniform(-0.1, 0.1) init, mirroring nn.init.uniform_ in the module."""
    params = []
    for i in range(layers):
        key, kw, kb = jax.random.split(key, 3)
        din, dout = dims[i], dims[i + 1]
        w = jax.random.uniform(kw, (din, dout), jnp.float32, -0.1, 0.1)
        b = jax.random.uniform(kb, (1, dout), jnp.float32, -0.1, 0.1)
        params.append((w, b))
    return params


def reference_mlp_mixed(x, params, weight_dtype=jnp.bfloat16, gelu_approx="tanh"):
    """Same math as the kernel (bf16 MXU operands, f32 accumulation, chosen GELU)."""
    gelu_fn = _gelu_tanh if gelu_approx == "tanh" else _gelu_exact
    h = x.astype(jnp.float32)
    for w, b in params:
        z = jnp.dot(h.astype(weight_dtype), w.astype(weight_dtype),
                    preferred_element_type=jnp.float32) + b
        h = gelu_fn(z)
    return h.astype(x.dtype)


def reference_mlp_f32(x, params):
    """Pure-f32 exact-erf torch-semantics reference (informational diff only)."""
    h = x
    for w, b in params:
        z = h @ w + b
        h = _gelu_exact(z)
    return h


if __name__ == "__main__":
    # Module defaults: layers=3, in_dim=256, out_dim -> in_dim, no inter_dims
    #   => dims = [256, 256], len==2 branch => all hidden dims = avg = 256
    #   => 3 x (Linear(256, 256) + GELU)
    LAYERS = 3
    IN_DIM = 256
    BATCH = 8
    dims = [IN_DIM] * (LAYERS + 1)

    key = jax.random.PRNGKey(0)
    key, kx = jax.random.split(key)
    x = jax.random.normal(kx, (BATCH, IN_DIM), jnp.float32)
    params = init_params(key, LAYERS, dims)

    # Default (tanh-GELU, fast) path.
    out = jax.block_until_ready(mlp_forward(x, params))
    assert out.shape == (BATCH, IN_DIM)
    ref = reference_mlp_mixed(x, params, gelu_approx="tanh")
    assert jnp.allclose(out, ref, atol=5e-3, rtol=5e-3), "mismatch vs. tanh-GELU reference"

    # Exact-GELU path (torch approximate='none' semantics) still supported.
    out_exact = jax.block_until_ready(mlp_forward(x, params, gelu_approx="none"))
    ref_exact = reference_mlp_mixed(x, params, gelu_approx="none")
    assert jnp.allclose(out_exact, ref_exact, atol=5e-3, rtol=5e-3), "mismatch vs. exact-GELU reference"

    # Multi-tile batch path: >=2 batch tiles so the 'parallel' axis can split
    # across v7x's two TensorCores; also exercises the tile-size logic.
    key, kx2 = jax.random.split(key)
    x2 = jax.random.normal(kx2, (64, IN_DIM), jnp.float32)
    out2 = jax.block_until_ready(mlp_forward(x2, params))
    ref2 = reference_mlp_mixed(x2, params, gelu_approx="tanh")
    assert jnp.allclose(out2, ref2, atol=5e-3, rtol=5e-3), "mismatch on multi-tile batch"

    # Informational: deviation from exact-f32 torch semantics (bf16 weights + tanh GELU).
    max_diff = float(jnp.max(jnp.abs(out - reference_mlp_f32(x, params))))
    print(f"max |out - f32_exact_ref| = {max_diff:.3e}")

    print("KERNEL_OK")
</pallas_src>

<mosaic_0001>
module attributes {stable_mosaic.version = 11 : i64} {
  func.func @kernel(%arg0: i32, %arg1: memref<8x256xf32, #tpu.memory_space<vmem>>, %arg2: memref<256x256xbf16, #tpu.memory_space<vmem>>, %arg3: memref<1x256xf32, #tpu.memory_space<vmem>>, %arg4: memref<256x256xbf16, #tpu.memory_space<vmem>>, %arg5: memref<1x256xf32, #tpu.memory_space<vmem>>, %arg6: memref<256x256xbf16, #tpu.memory_space<vmem>>, %arg7: memref<1x256xf32, #tpu.memory_space<vmem>>, %arg8: memref<8x256xf32, #tpu.memory_space<vmem>>) attributes {dimension_semantics = [#tpu.dimension_semantics<parallel>], iteration_bounds = array<i64: 1>, scalar_prefetch = 0 : i64, scratch_operands = 0 : i64, tpu.core_type = #tpu.core_type<tc>, window_params = [{transform_indices = @transform_0, window_bounds = array<i64: 8, 256>}, {pipeline_mode = #tpu.pipeline_mode<synchronous>, transform_indices = @transform_1, window_bounds = array<i64: 256, 256>}, {pipeline_mode = #tpu.pipeline_mode<synchronous>, transform_indices = @transform_2, window_bounds = array<i64: 1, 256>}, {pipeline_mode = #tpu.pipeline_mode<synchronous>, transform_indices = @transform_3, window_bounds = array<i64: 256, 256>}, {pipeline_mode = #tpu.pipeline_mode<synchronous>, transform_indices = @transform_4, window_bounds = array<i64: 1, 256>}, {pipeline_mode = #tpu.pipeline_mode<synchronous>, transform_indices = @transform_5, window_bounds = array<i64: 256, 256>}, {pipeline_mode = #tpu.pipeline_mode<synchronous>, transform_indices = @transform_6, window_bounds = array<i64: 1, 256>}, {transform_indices = @transform_7, window_bounds = array<i64: 8, 256>}]} {
    %c0 = arith.constant 0 : index
    %c0_0 = arith.constant 0 : index
    %0 = vector.load %arg1[%c0, %c0_0] : memref<8x256xf32, #tpu.memory_space<vmem>>, vector<8x256xf32>
    %1 = arith.truncf %0 : vector<8x256xf32> to vector<8x256xbf16>
    %c0_1 = arith.constant 0 : index
    %c0_2 = arith.constant 0 : index
    %2 = vector.load %arg2[%c0_1, %c0_2] : memref<256x256xbf16, #tpu.memory_space<vmem>>, vector<256x256xbf16>
    %cst = arith.constant dense<0.000000e+00> : vector<8x256xf32>
    %3 = tpu.matmul %1, %2, %cst {dimension_numbers = #tpu.dot_dimension_numbers<[1], [0], [0], [1], [0, 0, 1, 1], [], []>} : vector<8x256xbf16>, vector<256x256xbf16>, vector<8x256xf32> -> vector<8x256xf32>
    %c0_3 = arith.constant 0 : index
    %c0_4 = arith.constant 0 : index
    %4 = vector.load %arg3[%c0_3, %c0_4] : memref<1x256xf32, #tpu.memory_space<vmem>>, vector<1x256xf32>
    %5 = vector.broadcast %4 : vector<1x256xf32> to vector<8x256xf32>
    %6 = arith.addf %3, %5 : vector<8x256xf32>
    %cst_5 = arith.constant 5.000000e-01 : f32
    %7 = vector.broadcast %cst_5 : f32 to vector<8x256xf32>
    %8 = arith.mulf %7, %6 : vector<8x256xf32>
    %9 = arith.mulf %6, %6 : vector<8x256xf32>
    %10 = arith.mulf %9, %6 : vector<8x256xf32>
    %cst_6 = arith.constant 4.471500e-02 : f32
    %11 = vector.broadcast %cst_6 : f32 to vector<8x256xf32>
    %12 = arith.mulf %11, %10 : vector<8x256xf32>
    %13 = arith.addf %6, %12 : vector<8x256xf32>
    %cst_7 = arith.constant 0.797884583 : f32
    %14 = vector.broadcast %cst_7 : f32 to vector<8x256xf32>
    %15 = arith.mulf %14, %13 : vector<8x256xf32>
    %16 = math.tanh %15 : vector<8x256xf32>
    %cst_8 = arith.constant 1.000000e+00 : f32
    %17 = vector.broadcast %cst_8 : f32 to vector<8x256xf32>
    %18 = arith.addf %17, %16 : vector<8x256xf32>
    %19 = arith.mulf %8, %18 : vector<8x256xf32>
    %20 = arith.truncf %19 : vector<8x256xf32> to vector<8x256xbf16>
    %c0_9 = arith.constant 0 : index
    %c0_10 = arith.constant 0 : index
    %21 = vector.load %arg4[%c0_9, %c0_10] : memref<256x256xbf16, #tpu.memory_space<vmem>>, vector<256x256xbf16>
    %cst_11 = arith.constant dense<0.000000e+00> : vector<8x256xf32>
    %22 = tpu.matmul %20, %21, %cst_11 {dimension_numbers = #tpu.dot_dimension_numbers<[1], [0], [0], [1], [0, 0, 1, 1], [], []>} : vector<8x256xbf16>, vector<256x256xbf16>, vector<8x256xf32> -> vector<8x256xf32>
    %c0_12 = arith.constant 0 : index
    %c0_13 = arith.constant 0 : index
    %23 = vector.load %arg5[%c0_12, %c0_13] : memref<1x256xf32, #tpu.memory_space<vmem>>, vector<1x256xf32>
    %24 = vector.broadcast %23 : vector<1x256xf32> to vector<8x256xf32>
    %25 = arith.addf %22, %24 : vector<8x256xf32>
    %cst_14 = arith.constant 5.000000e-01 : f32
    %26 = vector.broadcast %cst_14 : f32 to vector<8x256xf32>
    %27 = arith.mulf %26, %25 : vector<8x256xf32>
    %28 = arith.mulf %25, %25 : vector<8x256xf32>
    %29 = arith.mulf %28, %25 : vector<8x256xf32>
    %cst_15 = arith.constant 4.471500e-02 : f32
    %30 = vector.broadcast %cst_15 : f32 to vector<8x256xf32>
    %31 = arith.mulf %30, %29 : vector<8x256xf32>
    %32 = arith.addf %25, %31 : vector<8x256xf32>
    %cst_16 = arith.constant 0.797884583 : f32
    %33 = vector.broadcast %cst_16 : f32 to vector<8x256xf32>
    %34 = arith.mulf %33, %32 : vector<8x256xf32>
    %35 = math.tanh %34 : vector<8x256xf32>
    %cst_17 = arith.constant 1.000000e+00 : f32
    %36 = vector.broadcast %cst_17 : f32 to vector<8x256xf32>
    %37 = arith.addf %36, %35 : vector<8x256xf32>
    %38 = arith.mulf %27, %37 : vector<8x256xf32>
    %39 = arith.truncf %38 : vector<8x256xf32> to vector<8x256xbf16>
    %c0_18 = arith.constant 0 : index
    %c0_19 = arith.constant 0 : index
    %40 = vector.load %arg6[%c0_18, %c0_19] : memref<256x256xbf16, #tpu.memory_space<vmem>>, vector<256x256xbf16>
    %cst_20 = arith.constant dense<0.000000e+00> : vector<8x256xf32>
    %41 = tpu.matmul %39, %40, %cst_20 {dimension_numbers = #tpu.dot_dimension_numbers<[1], [0], [0], [1], [0, 0, 1, 1], [], []>} : vector<8x256xbf16>, vector<256x256xbf16>, vector<8x256xf32> -> vector<8x256xf32>
    %c0_21 = arith.constant 0 : index
    %c0_22 = arith.constant 0 : index
    %42 = vector.load %arg7[%c0_21, %c0_22] : memref<1x256xf32, #tpu.memory_space<vmem>>, vector<1x256xf32>
    %43 = vector.broadcast %42 : vector<1x256xf32> to vector<8x256xf32>
    %44 = arith.addf %41, %43 : vector<8x256xf32>
    %cst_23 = arith.constant 5.000000e-01 : f32
    %45 = vector.broadcast %cst_23 : f32 to vector<8x256xf32>
    %46 = arith.mulf %45, %44 : vector<8x256xf32>
    %47 = arith.mulf %44, %44 : vector<8x256xf32>
    %48 = arith.mulf %47, %44 : vector<8x256xf32>
    %cst_24 = arith.constant 4.471500e-02 : f32
    %49 = vector.broadcast %cst_24 : f32 to vector<8x256xf32>
    %50 = arith.mulf %49, %48 : vector<8x256xf32>
    %51 = arith.addf %44, %50 : vector<8x256xf32>
    %cst_25 = arith.constant 0.797884583 : f32
    %52 = vector.broadcast %cst_25 : f32 to vector<8x256xf32>
    %53 = arith.mulf %52, %51 : vector<8x256xf32>
    %54 = math.tanh %53 : vector<8x256xf32>
    %cst_26 = arith.constant 1.000000e+00 : f32
    %55 = vector.broadcast %cst_26 : f32 to vector<8x256xf32>
    %56 = arith.addf %55, %54 : vector<8x256xf32>
    %57 = arith.mulf %46, %56 : vector<8x256xf32>
    %c0_27 = arith.constant 0 : index
    %c0_28 = arith.constant 0 : index
    %58 = vector.load %arg8[%c0_27, %c0_28] : memref<8x256xf32, #tpu.memory_space<vmem>>, vector<8x256xf32>
    tpu.vector_store %arg8[%c0_27, %c0_28], %57 {strides = array<i32>} : memref<8x256xf32, #tpu.memory_space<vmem>>, vector<8x256xf32>,
    return
  }
  func.func @transform_0(%arg0: i32) -> (i32, i32) {
    %c0_i32 = arith.constant 0 : i32
    %c0_i32_0 = arith.constant 0 : i32
    return %arg0, %c0_i32 : i32, i32
  }
  func.func @transform_1(%arg0: i32) -> (i32, i32) {
    %c0_i32 = arith.constant 0 : i32
    %c0_i32_0 = arith.constant 0 : i32
    %c0_i32_1 = arith.constant 0 : i32
    return %c0_i32, %c0_i32_0 : i32, i32
  }
  func.func @transform_2(%arg0: i32) -> (i32, i32) {
    %c0_i32 = arith.constant 0 : i32
    %c0_i32_0 = arith.constant 0 : i32
    %c0_i32_1 = arith.constant 0 : i32
    return %c0_i32, %c0_i32_0 : i32, i32
  }
  func.func @transform_3(%arg0: i32) -> (i32, i32) {
    %c0_i32 = arith.constant 0 : i32
    %c0_i32_0 = arith.constant 0 : i32
    %c0_i32_1 = arith.constant 0 : i32
    return %c0_i32, %c0_i32_0 : i32, i32
  }
  func.func @transform_4(%arg0: i32) -> (i32, i32) {
    %c0_i32 = arith.constant 0 : i32
    %c0_i32_0 = arith.constant 0 : i32
    %c0_i32_1 = arith.constant 0 : i32
    return %c0_i32, %c0_i32_0 : i32, i32
  }
  func.func @transform_5(%arg0: i32) -> (i32, i32) {
    %c0_i32 = arith.constant 0 : i32
    %c0_i32_0 = arith.constant 0 : i32
    %c0_i32_1 = arith.constant 0 : i32
    return %c0_i32, %c0_i32_0 : i32, i32
  }
  func.func @transform_6(%arg0: i32) -> (i32, i32) {
    %c0_i32 = arith.constant 0 : i32
    %c0_i32_0 = arith.constant 0 : i32
    %c0_i32_1 = arith.constant 0 : i32
    return %c0_i32, %c0_i32_0 : i32, i32
  }
  func.func @transform_7(%arg0: i32) -> (i32, i32) {
    %c0_i32 = arith.constant 0 : i32
    %c0_i32_0 = arith.constant 0 : i32
    return %arg0, %c0_i32 : i32, i32
  }
}

</mosaic_0001>

<llo_original>
// kernel: tpu_custom_call.1
$region0: #{tpu_custom_call.1}
  #allocation0 [shape = 'u32[]', space=smem, size = 0x4, offset = 0x4, fixed_abs, tag = 'smem constant byte address 0x4 - core index']
  #allocation1 [shape = 'u32[144,128]{1,0:T(1,128)}', space=vmem, size = 0x12000, scoped, tag = 'internal scratch']
  %s0 = inlined_call_operand.hbm [shape: f32[8,256], index: 0, kind: input, shape index: {}]
  %s1 = inlined_call_operand.hbm [shape: bf16[256,256], index: 1, kind: input, shape index: {}]
  %s2 = inlined_call_operand.vmem [shape: f32[1,256], index: 2, kind: input, shape index: {}]
  %s3 = inlined_call_operand.hbm [shape: bf16[256,256], index: 3, kind: input, shape index: {}]
  %s4 = inlined_call_operand.vmem [shape: f32[1,256], index: 4, kind: input, shape index: {}]
  %s5 = inlined_call_operand.hbm [shape: bf16[256,256], index: 5, kind: input, shape index: {}]
  %s6 = inlined_call_operand.vmem [shape: f32[1,256], index: 6, kind: input, shape index: {}]
  %s7 = inlined_call_operand.hbm [shape: f32[8,256], index: 7, kind: output, shape index: {}]
  %s8 = sld [smem:[#allocation0]]
  $region54: #{tpu_custom_call.1} parent=0
    _
  %s10 = ssub.s32 1, %s8
  %s11 = scalar_select 0, %s10, %s8
  $region1: #{tpu_custom_call.1} parent=0
    #allocation2 [shape = 'u8[8192]{0}', space=vmem, size = 0x2000, scoped, tag = 'input window, operand 0, single buffered']
    #allocation3 [shape = 's32[1]{0}', space=sflag, size = 0x4, scoped, tag = 'scoped memory for tpu_custom_call.1']
    #allocation4 [shape = 's32[1]{0}', space=sflag, size = 0x4, scoped, tag = 'scoped memory for tpu_custom_call.1']
    #allocation5 [shape = 'u8[131072]{0}', space=vmem, size = 0x20000, scoped, tag = 'input window, operand 1, single buffered']
    #allocation6 [shape = 's32[1]{0}', space=sflag, size = 0x4, scoped, tag = 'scoped memory for tpu_custom_call.1']
    #allocation7 [shape = 'u8[131072]{0}', space=vmem, size = 0x20000, scoped, tag = 'input window, operand 3, single buffered']
    #allocation8 [shape = 'u8[131072]{0}', space=vmem, size = 0x20000, scoped, tag = 'input window, operand 5, single buffered']
    #allocation9 [shape = 's32[1]{0}', space=sflag, size = 0x4, scoped, tag = 'scoped memory for tpu_custom_call.1']
    #allocation10 [shape = 'u8[8192]{0}', space=vmem, size = 0x2000, scoped, tag = 'output window, operand 0, single buffered']
    %12 = vsyncpa [#allocation3], 0
    %13 = vsyncpa [#allocation6], 0
    %14 = vsyncpa [#allocation9], 0
    %15 = vsyncpa [#allocation4], 0
    // Predicated region
    $region2: #{tpu_custom_call.1} parent=1 // pred_check
      _
    $region3: #{tpu_custom_call.1} parent=1 // pred_check_branch
      %17 = sbr.rel (0) target = $region5
    $region4: #{tpu_custom_call.1} parent=1 // pred_region
      %s19 = ssub.s32 256, 256
      %20 = vsyncadd [#allocation3], %s19
      %s22 = sshll.u32 [#allocation2], 4
      %s23 = int_to_ptr.vmem [resolvable:$true] %s22
      %25 = dma.hbm_to_vmem [thread:$0]  %s0, 256, %s23, [#allocation3]
    $region5: #{tpu_custom_call.1} parent=1 // pred_fallthru
      _
    // Predicated region
    $region6: #{tpu_custom_call.1} parent=1 // pred_check
      _
    $region7: #{tpu_custom_call.1} parent=1 // pred_check_branch
      %27 = sbr.rel (0) target = $region9
    $region8: #{tpu_custom_call.1} parent=1 // pred_region
      %s29 = ssub.s32 4096, 4096
      %30 = vsyncadd [#allocation6], %s29
      %s31 = sshll.u32 [#allocation5], 4
      %s32 = int_to_ptr.vmem [resolvable:$true] %s31
      %37 = dma.hbm_to_vmem [thread:$0]  %s1, 4096, %s32, [#allocation6], 128, 128, 8
    $region9: #{tpu_custom_call.1} parent=1 // pred_fallthru
      _
    // Predicated region
    $region10: #{tpu_custom_call.1} parent=1 // pred_check
      _
    $region11: #{tpu_custom_call.1} parent=1 // pred_check_branch
      %39 = sbr.rel (0) target = $region13
    $region12: #{tpu_custom_call.1} parent=1 // pred_region
      _
    $region13: #{tpu_custom_call.1} parent=1 // pred_fallthru
      _
    // Predicated region
    $region14: #{tpu_custom_call.1} parent=1 // pred_check
      _
    $region15: #{tpu_custom_call.1} parent=1 // pred_check_branch
      %41 = sbr.rel (0) target = $region17
    $region16: #{tpu_custom_call.1} parent=1 // pred_region
      %s43 = ssub.s32 4096, 4096
      %44 = vsyncadd [#allocation6], %s43
      %s45 = sshll.u32 [#allocation7], 4
      %s46 = int_to_ptr.vmem [resolvable:$true] %s45
      %51 = dma.hbm_to_vmem [thread:$0]  %s3, 4096, %s46, [#allocation6], 128, 128, 8
    $region17: #{tpu_custom_call.1} parent=1 // pred_fallthru
      _
    // Predicated region
    $region18: #{tpu_custom_call.1} parent=1 // pred_check
      _
    $region19: #{tpu_custom_call.1} parent=1 // pred_check_branch
      %53 = sbr.rel (0) target = $region21
    $region20: #{tpu_custom_call.1} parent=1 // pred_region
      _
    $region21: #{tpu_custom_call.1} parent=1 // pred_fallthru
      _
    // Predicated region
    $region22: #{tpu_custom_call.1} parent=1 // pred_check
      _
    $region23: #{tpu_custom_call.1} parent=1 // pred_check_branch
      %55 = sbr.rel (0) target = $region25
    $region24: #{tpu_custom_call.1} parent=1 // pred_region
      %s57 = ssub.s32 4096, 4096
      %58 = vsyncadd [#allocation9], %s57
      %s59 = sshll.u32 [#allocation8], 4
      %s60 = int_to_ptr.vmem [resolvable:$true] %s59
      %65 = dma.hbm_to_vmem [thread:$0]  %s5, 4096, %s60, [#allocation9], 128, 128, 8
    $region25: #{tpu_custom_call.1} parent=1 // pred_fallthru
      _
    // Predicated region
    $region26: #{tpu_custom_call.1} parent=1 // pred_check
      _
    $region27: #{tpu_custom_call.1} parent=1 // pred_check_branch
      %67 = sbr.rel (0) target = $region29
    $region28: #{tpu_custom_call.1} parent=1 // pred_region
      _
    $region29: #{tpu_custom_call.1} parent=1 // pred_fallthru
      _
    // Predicated region
    $region30: #{tpu_custom_call.1} parent=1 // pred_check
      _
    $region31: #{tpu_custom_call.1} parent=1 // pred_check_branch
      %69 = sbr.rel (0) target = $region33
    $region32: #{tpu_custom_call.1} parent=1 // pred_region
      %70 = dma.done [#allocation3], 256
    $region33: #{tpu_custom_call.1} parent=1 // pred_fallthru
      _
    // Predicated region
    $region34: #{tpu_custom_call.1} parent=1 // pred_check
      _
    $region35: #{tpu_custom_call.1} parent=1 // pred_check_branch
      %72 = sbr.rel (0) target = $region37
    $region36: #{tpu_custom_call.1} parent=1 // pred_region
      %73 = dma.done [#allocation6], 4096
    $region37: #{tpu_custom_call.1} parent=1 // pred_fallthru
      _
    // Predicated region
    $region38: #{tpu_custom_call.1} parent=1 // pred_check
      _
    $region39: #{tpu_custom_call.1} parent=1 // pred_check_branch
      %75 = sbr.rel (0) target = $region41
    $region40: #{tpu_custom_call.1} parent=1 // pred_region
      %76 = dma.done [#allocation6], 4096
    $region41: #{tpu_custom_call.1} parent=1 // pred_fallthru
      _
    // Predicated region
    $region42: #{tpu_custom_call.1} parent=1 // pred_check
      _
    $region43: #{tpu_custom_call.1} parent=1 // pred_check_branch
      %78 = sbr.rel (0) target = $region45
    $region44: #{tpu_custom_call.1} parent=1 // pred_region
      %79 = dma.done [#allocation9], 4096
    $region45: #{tpu_custom_call.1} parent=1 // pred_fallthru
      _
    %v80 = vld [vmem:[#allocation2] sm:$0xff]
    %v81 = vld [vmem:[#allocation2 + $0x8] sm:$0xff]
    %v82 = vpack.c.bf16 %v80, %v80
    %v83 = vpack.c.bf16 %v81, %v81
    %v84 = vld [vmem:[#allocation5] sm:$0xff]
    %v85 = vld [vmem:[#allocation5 + $0x8] sm:$0xff]
    %v86 = vld [vmem:[#allocation5 + $0x10] sm:$0xff]
    %v87 = vld [vmem:[#allocation5 + $0x18] sm:$0xff]
    %v88 = vld [vmem:[#allocation5 + $0x20] sm:$0xff]
    %v89 = vld [vmem:[#allocation5 + $0x28] sm:$0xff]
    %v90 = vld [vmem:[#allocation5 + $0x30] sm:$0xff]
    %v91 = vld [vmem:[#allocation5 + $0x38] sm:$0xff]
    %v92 = vld [vmem:[#allocation5 + $0x40] sm:$0xff]
    %v93 = vld [vmem:[#allocation5 + $0x48] sm:$0xff]
    %v94 = vld [vmem:[#allocation5 + $0x50] sm:$0xff]
    %v95 = vld [vmem:[#allocation5 + $0x58] sm:$0xff]
    %v96 = vld [vmem:[#allocation5 + $0x60] sm:$0xff]
    %v97 = vld [vmem:[#allocation5 + $0x68] sm:$0xff]
    %v98 = vld [vmem:[#allocation5 + $0x70] sm:$0xff]
    %v99 = vld [vmem:[#allocation5 + $0x78] sm:$0xff]
    %v100 = vld [vmem:[#allocation5 + $0x80] sm:$0xff]
    %v101 = vld [vmem:[#allocation5 + $0x88] sm:$0xff]
    %v102 = vld [vmem:[#allocation5 + $0x90] sm:$0xff]
    %v103 = vld [vmem:[#allocation5 + $0x98] sm:$0xff]
    %v104 = vld [vmem:[#allocation5 + $0xa0] sm:$0xff]
    %v105 = vld [vmem:[#allocation5 + $0xa8] sm:$0xff]
    %v106 = vld [vmem:[#allocation5 + $0xb0] sm:$0xff]
    %v107 = vld [vmem:[#allocation5 + $0xb8] sm:$0xff]
    %v108 = vld [vmem:[#allocation5 + $0xc0] sm:$0xff]
    %v109 = vld [vmem:[#allocation5 + $0xc8] sm:$0xff]
    %v110 = vld [vmem:[#allocation5 + $0xd0] sm:$0xff]
    %v111 = vld [vmem:[#allocation5 + $0xd8] sm:$0xff]
    %v112 = vld [vmem:[#allocation5 + $0xe0] sm:$0xff]
    %v113 = vld [vmem:[#allocation5 + $0xe8] sm:$0xff]
    %v114 = vld [vmem:[#allocation5 + $0xf0] sm:$0xff]
    %v115 = vld [vmem:[#allocation5 + $0xf8] sm:$0xff]
    %v116 = vld [vmem:[%s2] sm:$0x3]
    %v118 = vlaneseq
    %v119 = vshrl.u32 %v118, 7
    %v120 = vsub.s32 0, %v119
    %v121 = vrot.slane %v116, %v120
    %v122 = vlaneseq
    %v123 = vshrl.u32 %v122, 7
    %v124 = vsub.s32 1, %v123
    %v125 = vrot.slane %v116, %v124
    %v160 = vunpack.c.l.b16 %v84
    %v161 = vunpack.c.h.b16 %v84
    %v162 = vunpack.c.l.b16 %v85
    %v163 = vunpack.c.h.b16 %v85
    %v164 = vunpack.c.l.b16 %v86
    %v165 = vunpack.c.h.b16 %v86
    %v166 = vunpack.c.l.b16 %v87
    %v167 = vunpack.c.h.b16 %v87
    %v168 = vunpack.c.l.b16 %v88
    %v169 = vunpack.c.h.b16 %v88
    %v170 = vunpack.c.l.b16 %v89
    %v171 = vunpack.c.h.b16 %v89
    %v172 = vunpack.c.l.b16 %v90
    %v173 = vunpack.c.h.b16 %v90
    %v174 = vunpack.c.l.b16 %v91
    %v175 = vunpack.c.h.b16 %v91
    %v176 = vunpack.c.l.b16 %v92
    %v177 = vunpack.c.h.b16 %v92
    %v178 = vunpack.c.l.b16 %v93
    %v179 = vunpack.c.h.b16 %v93
    %v180 = vunpack.c.l.b16 %v94
    %v181 = vunpack.c.h.b16 %v94
    %v182 = vunpack.c.l.b16 %v95
    %v183 = vunpack.c.h.b16 %v95
    %v184 = vunpack.c.l.b16 %v96
    %v185 = vunpack.c.h.b16 %v96
    %v186 = vunpack.c.l.b16 %v97
    %v187 = vunpack.c.h.b16 %v97
    %v188 = vunpack.c.l.b16 %v98
    %v189 = vunpack.c.h.b16 %v98
    %v190 = vunpack.c.l.b16 %v99
    %v191 = vunpack.c.h.b16 %v99
    %v192 = vunpack.c.l.b16 %v100
    %v193 = vunpack.c.h.b16 %v100
    %v194 = vunpack.c.l.b16 %v101
    %v195 = vunpack.c.h.b16 %v101
    %v196 = vunpack.c.l.b16 %v102
    %v197 = vunpack.c.h.b16 %v102
    %v198 = vunpack.c.l.b16 %v103
    %v199 = vunpack.c.h.b16 %v103
    %v200 = vunpack.c.l.b16 %v104
    %v201 = vunpack.c.h.b16 %v104
    %v202 = vunpack.c.l.b16 %v105
    %v203 = vunpack.c.h.b16 %v105
    %v204 = vunpack.c.l.b16 %v106
    %v205 = vunpack.c.h.b16 %v106
    %v206 = vunpack.c.l.b16 %v107
    %v207 = vunpack.c.h.b16 %v107
    %v208 = vunpack.c.l.b16 %v108
    %v209 = vunpack.c.h.b16 %v108
    %v210 = vunpack.c.l.b16 %v109
    %v211 = vunpack.c.h.b16 %v109
    %v212 = vunpack.c.l.b16 %v110
    %v213 = vunpack.c.h.b16 %v110
    %v214 = vunpack.c.l.b16 %v111
    %v215 = vunpack.c.h.b16 %v111
    %v216 = vunpack.c.l.b16 %v112
    %v217 = vunpack.c.h.b16 %v112
    %v218 = vunpack.c.l.b16 %v113
    %v219 = vunpack.c.h.b16 %v113
    %v220 = vunpack.c.l.b16 %v114
    %v221 = vunpack.c.h.b16 %v114
    %v222 = vunpack.c.l.b16 %v115
    %v223 = vunpack.c.h.b16 %v115
    %v224 = vpack.c.b16 %v162, %v160
    %v225 = vpack.c.b16 %v163, %v161
    %v226 = vpack.c.b16 %v166, %v164
    %v227 = vpack.c.b16 %v167, %v165
    %v228 = vpack.c.b16 %v170, %v168
    %v229 = vpack.c.b16 %v171, %v169
    %v230 = vpack.c.b16 %v174, %v172
    %v231 = vpack.c.b16 %v175, %v173
    %v232 = vpack.c.b16 %v178, %v176
    %v233 = vpack.c.b16 %v179, %v177
    %v234 = vpack.c.b16 %v182, %v180
    %v235 = vpack.c.b16 %v183, %v181
    %v236 = vpack.c.b16 %v186, %v184
    %v237 = vpack.c.b16 %v187, %v185
    %v238 = vpack.c.b16 %v190, %v188
    %v239 = vpack.c.b16 %v191, %v189
    %v240 = vpack.c.b16 %v194, %v192
    %v241 = vpack.c.b16 %v195, %v193
    %v242 = vpack.c.b16 %v198, %v196
    %v243 = vpack.c.b16 %v199, %v197
    %v244 = vpack.c.b16 %v202, %v200
    %v245 = vpack.c.b16 %v203, %v201
    %v246 = vpack.c.b16 %v206, %v204
    %v247 = vpack.c.b16 %v207, %v205
    %v248 = vpack.c.b16 %v210, %v208
    %v249 = vpack.c.b16 %v211, %v209
    %v250 = vpack.c.b16 %v214, %v212
    %v251 = vpack.c.b16 %v215, %v213
    %v252 = vpack.c.b16 %v218, %v216
    %v253 = vpack.c.b16 %v219, %v217
    %v254 = vpack.c.b16 %v222, %v220
    %v255 = vpack.c.b16 %v223, %v221
    %288 = vmatprep.subr.bf16.mxu0 %v239
    %289 = vmatpush1.bf16.msra.mxu0 %v238
    %290 = vmatprep.subr.bf16.mxu0 %v237
    %291 = vmatpush1.bf16.msra.mxu0 %v236
    %292 = vmatprep.subr.bf16.mxu0 %v235
    %293 = vmatpush1.bf16.msra.mxu0 %v234
    %294 = vmatprep.subr.bf16.mxu0 %v233
    %295 = vmatpush1.bf16.msra.mxu0 %v232
    %296 = vmatprep.subr.bf16.mxu0 %v231
    %297 = vmatpush1.bf16.msra.mxu0 %v230
    %298 = vmatprep.subr.bf16.mxu0 %v229
    %299 = vmatpush1.bf16.msra.mxu0 %v228
    %300 = vmatprep.subr.bf16.mxu0 %v227
    %301 = vmatpush1.bf16.msra.mxu0 %v226
    %302 = vmatprep.subr.bf16.mxu0 %v225
    %303 = vmatpush1.bf16.msra.mxu0 %v224
    %304 = vmatprep.subr.bf16.mxu0 %v255
    %305 = vmatpush2.bf16.msra.mxu0 %v254
    %306 = vmatprep.subr.bf16.mxu0 %v253
    %307 = vmatpush2.bf16.msra.mxu0 %v252
    %308 = vmatprep.subr.bf16.mxu0 %v251
    %309 = vmatpush2.bf16.msra.mxu0 %v250
    %310 = vmatprep.subr.bf16.mxu0 %v249
    %311 = vmatpush2.bf16.msra.mxu0 %v248
    %312 = vmatprep.subr.bf16.mxu0 %v247
    %313 = vmatpush2.bf16.msra.mxu0 %v246
    %314 = vmatprep.subr.bf16.mxu0 %v245
    %315 = vmatpush2.bf16.msra.mxu0 %v244
    %316 = vmatprep.subr.bf16.mxu0 %v243
    %317 = vmatpush2.bf16.msra.mxu0 %v242
    %318 = vmatprep.subr.bf16.mxu0 %v241
    %319 = vmatpush2.bf16.msra.mxu0 %v240
    %320 = vmatprep.mubr.bf16.mxu0 %v83
    %321 = vmatmul.mubr.bf16.gmra.mxu0 %v82
    %v322 = vpop.f32.mrf.mxu0
    %v323 = vadd.f32 %v121, %v322
    %v324 = vpop.f32.mrf.mxu0
    %v325 = vadd.f32 %v125, %v324
    %v326 = vpop.f32.mrf.mxu0
    %v327 = vpop.f32.mrf.mxu0
    %328 = vdwg.mxu0
    %v329 = vmul.f32 %v323, 0.5
    %v330 = vmul.f32 %v325, 0.5
    %v331 = vmul.f32 %v323, %v323
    %v332 = vmul.f32 %v325, %v325
    %v333 = vmul.f32 %v331, %v323
    %v334 = vmul.f32 %v332, %v325
    %v335 = vmul.f32 %v333, 0.044715
    %v336 = vmul.f32 %v334, 0.044715
    %v337 = vadd.f32 %v323, %v335
    %v338 = vadd.f32 %v325, %v336
    %v339 = vmul.f32 %v337, 0.7978846
    %v340 = vmul.f32 %v338, 0.7978846
    %v341 = vtanh.pop %v339
    %v342 = vtanh.pop %v340
    %v343 = vadd.f32 %v341, 1.0
    %v344 = vadd.f32 %v342, 1.0
    %v345 = vmul.f32 %v329, %v343
    %v346 = vmul.f32 %v330, %v344
    %v347 = vpack.c.bf16 %v345, %v345
    %v348 = vpack.c.bf16 %v346, %v346
    %v349 = vld [vmem:[#allocation7] sm:$0xff]
    %v350 = vld [vmem:[#allocation7 + $0x8] sm:$0xff]
    %v351 = vld [vmem:[#allocation7 + $0x10] sm:$0xff]
    %v352 = vld [vmem:[#allocation7 + $0x18] sm:$0xff]
    %v353 = vld [vmem:[#allocation7 + $0x20] sm:$0xff]
    %v354 = vld [vmem:[#allocation7 + $0x28] sm:$0xff]
    %v355 = vld [vmem:[#allocation7 + $0x30] sm:$0xff]
    %v356 = vld [vmem:[#allocation7 + $0x38] sm:$0xff]
    %v357 = vld [vmem:[#allocation7 + $0x40] sm:$0xff]
    %v358 = vld [vmem:[#allocation7 + $0x48] sm:$0xff]
    %v359 = vld [vmem:[#allocation7 + $0x50] sm:$0xff]
    %v360 = vld [vmem:[#allocation7 + $0x58] sm:$0xff]
    %v361 = vld [vmem:[#allocation7 + $0x60] sm:$0xff]
    %v362 = vld [vmem:[#allocation7 + $0x68] sm:$0xff]
    %v363 = vld [vmem:[#allocation7 + $0x70] sm:$0xff]
    %v364 = vld [vmem:[#allocation7 + $0x78] sm:$0xff]
    %v365 = vld [vmem:[#allocation7 + $0x80] sm:$0xff]
    %v366 = vld [vmem:[#allocation7 + $0x88] sm:$0xff]
    %v367 = vld [vmem:[#allocation7 + $0x90] sm:$0xff]
    %v368 = vld [vmem:[#allocation7 + $0x98] sm:$0xff]
    %v369 = vld [vmem:[#allocation7 + $0xa0] sm:$0xff]
    %v370 = vld [vmem:[#allocation7 + $0xa8] sm:$0xff]
    %v371 = vld [vmem:[#allocation7 + $0xb0] sm:$0xff]
    %v372 = vld [vmem:[#allocation7 + $0xb8] sm:$0xff]
    %v373 = vld [vmem:[#allocation7 + $0xc0] sm:$0xff]
    %v374 = vld [vmem:[#allocation7 + $0xc8] sm:$0xff]
    %v375 = vld [vmem:[#allocation7 + $0xd0] sm:$0xff]
    %v376 = vld [vmem:[#allocation7 + $0xd8] sm:$0xff]
    %v377 = vld [vmem:[#allocation7 + $0xe0] sm:$0xff]
    %v378 = vld [vmem:[#allocation7 + $0xe8] sm:$0xff]
    %v379 = vld [vmem:[#allocation7 + $0xf0] sm:$0xff]
    %v380 = vld [vmem:[#allocation7 + $0xf8] sm:$0xff]
    %v381 = vld [vmem:[%s4] sm:$0x3]
    %v383 = vlaneseq
    %v384 = vshrl.u32 %v383, 7
    %v385 = vsub.s32 0, %v384
    %v386 = vrot.slane %v381, %v385
    %v387 = vlaneseq
    %v388 = vshrl.u32 %v387, 7
    %v389 = vsub.s32 1, %v388
    %v390 = vrot.slane %v381, %v389
    %v425 = vunpack.c.l.b16 %v349
    %v426 = vunpack.c.h.b16 %v349
    %v427 = vunpack.c.l.b16 %v350
    %v428 = vunpack.c.h.b16 %v350
    %v429 = vunpack.c.l.b16 %v351
    %v430 = vunpack.c.h.b16 %v351
    %v431 = vunpack.c.l.b16 %v352
    %v432 = vunpack.c.h.b16 %v352
    %v433 = vunpack.c.l.b16 %v353
    %v434 = vunpack.c.h.b16 %v353
    %v435 = vunpack.c.l.b16 %v354
    %v436 = vunpack.c.h.b16 %v354
    %v437 = vunpack.c.l.b16 %v355
    %v438 = vunpack.c.h.b16 %v355
    %v439 = vunpack.c.l.b16 %v356
    %v440 = vunpack.c.h.b16 %v356
    %v441 = vunpack.c.l.b16 %v357
    %v442 = vunpack.c.h.b16 %v357
    %v443 = vunpack.c.l.b16 %v358
    %v444 = vunpack.c.h.b16 %v358
    %v445 = vunpack.c.l.b16 %v359
    %v446 = vunpack.c.h.b16 %v359
    %v447 = vunpack.c.l.b16 %v360
    %v448 = vunpack.c.h.b16 %v360
    %v449 = vunpack.c.l.b16 %v361
    %v450 = vunpack.c.h.b16 %v361
    %v451 = vunpack.c.l.b16 %v362
    %v452 = vunpack.c.h.b16 %v362
    %v453 = vunpack.c.l.b16 %v363
    %v454 = vunpack.c.h.b16 %v363
    %v455 = vunpack.c.l.b16 %v364
    %v456 = vunpack.c.h.b16 %v364
    %v457 = vunpack.c.l.b16 %v365
    %v458 = vunpack.c.h.b16 %v365
    %v459 = vunpack.c.l.b16 %v366
    %v460 = vunpack.c.h.b16 %v366
    %v461 = vunpack.c.l.b16 %v367
    %v462 = vunpack.c.h.b16 %v367
    %v463 = vunpack.c.l.b16 %v368
    %v464 = vunpack.c.h.b16 %v368
    %v465 = vunpack.c.l.b16 %v369
    %v466 = vunpack.c.h.b16 %v369
    %v467 = vunpack.c.l.b16 %v370
    %v468 = vunpack.c.h.b16 %v370
    %v469 = vunpack.c.l.b16 %v371
    %v470 = vunpack.c.h.b16 %v371
    %v471 = vunpack.c.l.b16 %v372
    %v472 = vunpack.c.h.b16 %v372
    %v473 = vunpack.c.l.b16 %v373
    %v474 = vunpack.c.h.b16 %v373
    %v475 = vunpack.c.l.b16 %v374
    %v476 = vunpack.c.h.b16 %v374
    %v477 = vunpack.c.l.b16 %v375
    %v478 = vunpack.c.h.b16 %v375
    %v479 = vunpack.c.l.b16 %v376
    %v480 = vunpack.c.h.b16 %v376
    %v481 = vunpack.c.l.b16 %v377
    %v482 = vunpack.c.h.b16 %v377
    %v483 = vunpack.c.l.b16 %v378
    %v484 = vunpack.c.h.b16 %v378
    %v485 = vunpack.c.l.b16 %v379
    %v486 = vunpack.c.h.b16 %v379
    %v487 = vunpack.c.l.b16 %v380
    %v488 = vunpack.c.h.b16 %v380
    %v489 = vpack.c.b16 %v427, %v425
    %v490 = vpack.c.b16 %v428, %v426
    %v491 = vpack.c.b16 %v431, %v429
    %v492 = vpack.c.b16 %v432, %v430
    %v493 = vpack.c.b16 %v435, %v433
    %v494 = vpack.c.b16 %v436, %v434
    %v495 = vpack.c.b16 %v439, %v437
    %v496 = vpack.c.b16 %v440, %v438
    %v497 = vpack.c.b16 %v443, %v441
    %v498 = vpack.c.b16 %v444, %v442
    %v499 = vpack.c.b16 %v447, %v445
    %v500 = vpack.c.b16 %v448, %v446
    %v501 = vpack.c.b16 %v451, %v449
    %v502 = vpack.c.b16 %v452, %v450
    %v503 = vpack.c.b16 %v455, %v453
    %v504 = vpack.c.b16 %v456, %v454
    %v505 = vpack.c.b16 %v459, %v457
    %v506 = vpack.c.b16 %v460, %v458
    %v507 = vpack.c.b16 %v463, %v461
    %v508 = vpack.c.b16 %v464, %v462
    %v509 = vpack.c.b16 %v467, %v465
    %v510 = vpack.c.b16 %v468, %v466
    %v511 = vpack.c.b16 %v471, %v469
    %v512 = vpack.c.b16 %v472, %v470
    %v513 = vpack.c.b16 %v475, %v473
    %v514 = vpack.c.b16 %v476, %v474
    %v515 = vpack.c.b16 %v479, %v477
    %v516 = vpack.c.b16 %v480, %v478
    %v517 = vpack.c.b16 %v483, %v481
    %v518 = vpack.c.b16 %v484, %v482
    %v519 = vpack.c.b16 %v487, %v485
    %v520 = vpack.c.b16 %v488, %v486
    %553 = vmatprep.subr.bf16.mxu0 %v504
    %554 = vmatpush1.bf16.msra.mxu0 %v503
    %555 = vmatprep.subr.bf16.mxu0 %v502
    %556 = vmatpush1.bf16.msra.mxu0 %v501
    %557 = vmatprep.subr.bf16.mxu0 %v500
    %558 = vmatpush1.bf16.msra.mxu0 %v499
    %559 = vmatprep.subr.bf16.mxu0 %v498
    %560 = vmatpush1.bf16.msra.mxu0 %v497
    %561 = vmatprep.subr.bf16.mxu0 %v496
    %562 = vmatpush1.bf16.msra.mxu0 %v495
    %563 = vmatprep.subr.bf16.mxu0 %v494
    %564 = vmatpush1.bf16.msra.mxu0 %v493
    %565 = vmatprep.subr.bf16.mxu0 %v492
    %566 = vmatpush1.bf16.msra.mxu0 %v491
    %567 = vmatprep.subr.bf16.mxu0 %v490
    %568 = vmatpush1.bf16.msra.mxu0 %v489
    %569 = vmatprep.subr.bf16.mxu0 %v520
    %570 = vmatpush2.bf16.msra.mxu0 %v519
    %571 = vmatprep.subr.bf16.mxu0 %v518
    %572 = vmatpush2.bf16.msra.mxu0 %v517
    %573 = vmatprep.subr.bf16.mxu0 %v516
    %574 = vmatpush2.bf16.msra.mxu0 %v515
    %575 = vmatprep.subr.bf16.mxu0 %v514
    %576 = vmatpush2.bf16.msra.mxu0 %v513
    %577 = vmatprep.subr.bf16.mxu0 %v512
    %578 = vmatpush2.bf16.msra.mxu0 %v511
    %579 = vmatprep.subr.bf16.mxu0 %v510
    %580 = vmatpush2.bf16.msra.mxu0 %v509
    %581 = vmatprep.subr.bf16.mxu0 %v508
    %582 = vmatpush2.bf16.msra.mxu0 %v507
    %583 = vmatprep.subr.bf16.mxu0 %v506
    %584 = vmatpush2.bf16.msra.mxu0 %v505
    %585 = vmatprep.mubr.bf16.mxu0 %v348
    %586 = vmatmul.mubr.bf16.gmra.mxu0 %v347
    %v587 = vpop.f32.mrf.mxu0
    %v588 = vadd.f32 %v386, %v587
    %v589 = vpop.f32.mrf.mxu0
    %v590 = vadd.f32 %v390, %v589
    %v591 = vpop.f32.mrf.mxu0
    %v592 = vpop.f32.mrf.mxu0
    %593 = vdwg.mxu0
    %v594 = vmul.f32 %v588, 0.5
    %v595 = vmul.f32 %v590, 0.5
    %v596 = vmul.f32 %v588, %v588
    %v597 = vmul.f32 %v590, %v590
    %v598 = vmul.f32 %v596, %v588
    %v599 = vmul.f32 %v597, %v590
    %v600 = vmul.f32 %v598, 0.044715
    %v601 = vmul.f32 %v599, 0.044715
    %v602 = vadd.f32 %v588, %v600
    %v603 = vadd.f32 %v590, %v601
    %v604 = vmul.f32 %v602, 0.7978846
    %v605 = vmul.f32 %v603, 0.7978846
    %v606 = vtanh.pop %v604
    %v607 = vtanh.pop %v605
    %v608 = vadd.f32 %v606, 1.0
    %v609 = vadd.f32 %v607, 1.0
    %v610 = vmul.f32 %v594, %v608
    %v611 = vmul.f32 %v595, %v609
    %v612 = vpack.c.bf16 %v610, %v610
    %v613 = vpack.c.bf16 %v611, %v611
    %v614 = vld [vmem:[#allocation8] sm:$0xff]
    %v615 = vld [vmem:[#allocation8 + $0x8] sm:$0xff]
    %v616 = vld [vmem:[#allocation8 + $0x10] sm:$0xff]
    %v617 = vld [vmem:[#allocation8 + $0x18] sm:$0xff]
    %v618 = vld [vmem:[#allocation8 + $0x20] sm:$0xff]
    %v619 = vld [vmem:[#allocation8 + $0x28] sm:$0xff]
    %v620 = vld [vmem:[#allocation8 + $0x30] sm:$0xff]
    %v621 = vld [vmem:[#allocation8 + $0x38] sm:$0xff]
    %v622 = vld [vmem:[#allocation8 + $0x40] sm:$0xff]
    %v623 = vld [vmem:[#allocation8 + $0x48] sm:$0xff]
    %v624 = vld [vmem:[#allocation8 + $0x50] sm:$0xff]
    %v625 = vld [vmem:[#allocation8 + $0x58] sm:$0xff]
    %v626 = vld [vmem:[#allocation8 + $0x60] sm:$0xff]
    %v627 = vld [vmem:[#allocation8 + $0x68] sm:$0xff]
    %v628 = vld [vmem:[#allocation8 + $0x70] sm:$0xff]
    %v629 = vld [vmem:[#allocation8 + $0x78] sm:$0xff]
    %v630 = vld [vmem:[#allocation8 + $0x80] sm:$0xff]
    %v631 = vld [vmem:[#allocation8 + $0x88] sm:$0xff]
    %v632 = vld [vmem:[#allocation8 + $0x90] sm:$0xff]
    %v633 = vld [vmem:[#allocation8 + $0x98] sm:$0xff]
    %v634 = vld [vmem:[#allocation8 + $0xa0] sm:$0xff]
    %v635 = vld [vmem:[#allocation8 + $0xa8] sm:$0xff]
    %v636 = vld [vmem:[#allocation8 + $0xb0] sm:$0xff]
    %v637 = vld [vmem:[#allocation8 + $0xb8] sm:$0xff]
    %v638 = vld [vmem:[#allocation8 + $0xc0] sm:$0xff]
    %v639 = vld [vmem:[#allocation8 + $0xc8] sm:$0xff]
    %v640 = vld [vmem:[#allocation8 + $0xd0] sm:$0xff]
    %v641 = vld [vmem:[#allocation8 + $0xd8] sm:$0xff]
    %v642 = vld [vmem:[#allocation8 + $0xe0] sm:$0xff]
    %v643 = vld [vmem:[#allocation8 + $0xe8] sm:$0xff]
    %v644 = vld [vmem:[#allocation8 + $0xf0] sm:$0xff]
    %v645 = vld [vmem:[#allocation8 + $0xf8] sm:$0xff]
    %v646 = vld [vmem:[%s6] sm:$0x3]
    %v648 = vlaneseq
    %v649 = vshrl.u32 %v648, 7
    %v650 = vsub.s32 0, %v649
    %v651 = vrot.slane %v646, %v650
    %v652 = vlaneseq
    %v653 = vshrl.u32 %v652, 7
    %v654 = vsub.s32 1, %v653
    %v655 = vrot.slane %v646, %v654
    %v690 = vunpack.c.l.b16 %v614
    %v691 = vunpack.c.h.b16 %v614
    %v692 = vunpack.c.l.b16 %v615
    %v693 = vunpack.c.h.b16 %v615
    %v694 = vunpack.c.l.b16 %v616
    %v695 = vunpack.c.h.b16 %v616
    %v696 = vunpack.c.l.b16 %v617
    %v697 = vunpack.c.h.b16 %v617
    %v698 = vunpack.c.l.b16 %v618
    %v699 = vunpack.c.h.b16 %v618
    %v700 = vunpack.c.l.b16 %v619
    %v701 = vunpack.c.h.b16 %v619
    %v702 = vunpack.c.l.b16 %v620
    %v703 = vunpack.c.h.b16 %v620
    %v704 = vunpack.c.l.b16 %v621
    %v705 = vunpack.c.h.b16 %v621
    %v706 = vunpack.c.l.b16 %v622
    %v707 = vunpack.c.h.b16 %v622
    %v708 = vunpack.c.l.b16 %v623
    %v709 = vunpack.c.h.b16 %v623
    %v710 = vunpack.c.l.b16 %v624
    %v711 = vunpack.c.h.b16 %v624
    %v712 = vunpack.c.l.b16 %v625
    %v713 = vunpack.c.h.b16 %v625
    %v714 = vunpack.c.l.b16 %v626
    %v715 = vunpack.c.h.b16 %v626
    %v716 = vunpack.c.l.b16 %v627
    %v717 = vunpack.c.h.b16 %v627
    %v718 = vunpack.c.l.b16 %v628
    %v719 = vunpack.c.h.b16 %v628
    %v720 = vunpack.c.l.b16 %v629
    %v721 = vunpack.c.h.b16 %v629
    %v722 = vunpack.c.l.b16 %v630
    %v723 = vunpack.c.h.b16 %v630
    %v724 = vunpack.c.l.b16 %v631
    %v725 = vunpack.c.h.b16 %v631
    %v726 = vunpack.c.l.b16 %v632
    %v727 = vunpack.c.h.b16 %v632
    %v728 = vunpack.c.l.b16 %v633
    %v729 = vunpack.c.h.b16 %v633
    %v730 = vunpack.c.l.b16 %v634
    %v731 = vunpack.c.h.b16 %v634
    %v732 = vunpack.c.l.b16 %v635
    %v733 = vunpack.c.h.b16 %v635
    %v734 = vunpack.c.l.b16 %v636
    %v735 = vunpack.c.h.b16 %v636
    %v736 = vunpack.c.l.b16 %v637
    %v737 = vunpack.c.h.b16 %v637
    %v738 = vunpack.c.l.b16 %v638
    %v739 = vunpack.c.h.b16 %v638
    %v740 = vunpack.c.l.b16 %v639
    %v741 = vunpack.c.h.b16 %v639
    %v742 = vunpack.c.l.b16 %v640
    %v743 = vunpack.c.h.b16 %v640
    %v744 = vunpack.c.l.b16 %v641
    %v745 = vunpack.c.h.b16 %v641
    %v746 = vunpack.c.l.b16 %v642
    %v747 = vunpack.c.h.b16 %v642
    %v748 = vunpack.c.l.b16 %v643
    %v749 = vunpack.c.h.b16 %v643
    %v750 = vunpack.c.l.b16 %v644
    %v751 = vunpack.c.h.b16 %v644
    %v752 = vunpack.c.l.b16 %v645
    %v753 = vunpack.c.h.b16 %v645
    %v754 = vpack.c.b16 %v692, %v690
    %v755 = vpack.c.b16 %v693, %v691
    %v756 = vpack.c.b16 %v696, %v694
    %v757 = vpack.c.b16 %v697, %v695
    %v758 = vpack.c.b16 %v700, %v698
    %v759 = vpack.c.b16 %v701, %v699
    %v760 = vpack.c.b16 %v704, %v702
    %v761 = vpack.c.b16 %v705, %v703
    %v762 = vpack.c.b16 %v708, %v706
    %v763 = vpack.c.b16 %v709, %v707
    %v764 = vpack.c.b16 %v712, %v710
    %v765 = vpack.c.b16 %v713, %v711
    %v766 = vpack.c.b16 %v716, %v714
    %v767 = vpack.c.b16 %v717, %v715
    %v768 = vpack.c.b16 %v720, %v718
    %v769 = vpack.c.b16 %v721, %v719
    %v770 = vpack.c.b16 %v724, %v722
    %v771 = vpack.c.b16 %v725, %v723
    %v772 = vpack.c.b16 %v728, %v726
    %v773 = vpack.c.b16 %v729, %v727
    %v774 = vpack.c.b16 %v732, %v730
    %v775 = vpack.c.b16 %v733, %v731
    %v776 = vpack.c.b16 %v736, %v734
    %v777 = vpack.c.b16 %v737, %v735
    %v778 = vpack.c.b16 %v740, %v738
    %v779 = vpack.c.b16 %v741, %v739
    %v780 = vpack.c.b16 %v744, %v742
    %v781 = vpack.c.b16 %v745, %v743
    %v782 = vpack.c.b16 %v748, %v746
    %v783 = vpack.c.b16 %v749, %v747
    %v784 = vpack.c.b16 %v752, %v750
    %v785 = vpack.c.b16 %v753, %v751
    %818 = vmatprep.subr.bf16.mxu0 %v769
    %819 = vmatpush1.bf16.msra.mxu0 %v768
    %820 = vmatprep.subr.bf16.mxu0 %v767
    %821 = vmatpush1.bf16.msra.mxu0 %v766
    %822 = vmatprep.subr.bf16.mxu0 %v765
    %823 = vmatpush1.bf16.msra.mxu0 %v764
    %824 = vmatprep.subr.bf16.mxu0 %v763
    %825 = vmatpush1.bf16.msra.mxu0 %v762
    %826 = vmatprep.subr.bf16.mxu0 %v761
    %827 = vmatpush1.bf16.msra.mxu0 %v760
    %828 = vmatprep.subr.bf16.mxu0 %v759
    %829 = vmatpush1.bf16.msra.mxu0 %v758
    %830 = vmatprep.subr.bf16.mxu0 %v757
    %831 = vmatpush1.bf16.msra.mxu0 %v756
    %832 = vmatprep.subr.bf16.mxu0 %v755
    %833 = vmatpush1.bf16.msra.mxu0 %v754
    %834 = vmatprep.subr.bf16.mxu0 %v785
    %835 = vmatpush2.bf16.msra.mxu0 %v784
    %836 = vmatprep.subr.bf16.mxu0 %v783
    %837 = vmatpush2.bf16.msra.mxu0 %v782
    %838 = vmatprep.subr.bf16.mxu0 %v781
    %839 = vmatpush2.bf16.msra.mxu0 %v780
    %840 = vmatprep.subr.bf16.mxu0 %v779
    %841 = vmatpush2.bf16.msra.mxu0 %v778
    %842 = vmatprep.subr.bf16.mxu0 %v777
    %843 = vmatpush2.bf16.msra.mxu0 %v776
    %844 = vmatprep.subr.bf16.mxu0 %v775
    %845 = vmatpush2.bf16.msra.mxu0 %v774
    %846 = vmatprep.subr.bf16.mxu0 %v773
    %847 = vmatpush2.bf16.msra.mxu0 %v772
    %848 = vmatprep.subr.bf16.mxu0 %v771
    %849 = vmatpush2.bf16.msra.mxu0 %v770
    %850 = vmatprep.mubr.bf16.mxu0 %v613
    %851 = vmatmul.mubr.bf16.gmra.mxu0 %v612
    %v852 = vpop.f32.mrf.mxu0
    %v853 = vadd.f32 %v651, %v852
    %v854 = vpop.f32.mrf.mxu0
    %v855 = vadd.f32 %v655, %v854
    %v856 = vpop.f32.mrf.mxu0
    %v857 = vpop.f32.mrf.mxu0
    %858 = vdwg.mxu0
    %v859 = vmul.f32 %v853, 0.5
    %v860 = vmul.f32 %v855, 0.5
    %v861 = vmul.f32 %v853, %v853
    %v862 = vmul.f32 %v855, %v855
    %v863 = vmul.f32 %v861, %v853
    %v864 = vmul.f32 %v862, %v855
    %v865 = vmul.f32 %v863, 0.044715
    %v866 = vmul.f32 %v864, 0.044715
    %v867 = vadd.f32 %v853, %v865
    %v868 = vadd.f32 %v855, %v866
    %v869 = vmul.f32 %v867, 0.7978846
    %v870 = vmul.f32 %v868, 0.7978846
    %v871 = vtanh.pop %v869
    %v872 = vtanh.pop %v870
    %v873 = vadd.f32 %v871, 1.0
    %v874 = vadd.f32 %v872, 1.0
    %v875 = vmul.f32 %v859, %v873
    %v876 = vmul.f32 %v860, %v874
    %877 = vst [vmem:[#allocation10] sm:$0xff] %v875
    %878 = vst [vmem:[#allocation10 + $0x8] sm:$0xff] %v876
    // Predicated region
    $region46: #{tpu_custom_call.1} parent=1 // pred_check
      _
    $region47: #{tpu_custom_call.1} parent=1 // pred_check_branch
      %880 = sbr.rel (0) target = $region49
    $region48: #{tpu_custom_call.1} parent=1 // pred_region
      %s882 = ssub.s32 256, 256
      %883 = vsyncadd [#allocation4], %s882
      %s885 = sshll.u32 [#allocation10], 4
      %s886 = int_to_ptr.vmem [resolvable:$true] %s885
      %888 = dma.vmem_to_hbm [thread:$0]  %s886, 256, %s7, [#allocation4]
    $region49: #{tpu_custom_call.1} parent=1 // pred_fallthru
      _
    // Predicated region
    $region50: #{tpu_custom_call.1} parent=1 // pred_check
      _
    $region51: #{tpu_custom_call.1} parent=1 // pred_check_branch
      %890 = sbr.rel (0) target = $region53
    $region52: #{tpu_custom_call.1} parent=1 // pred_region
      %891 = dma.done [#allocation4], 256
    $region53: #{tpu_custom_call.1} parent=1 // pred_fallthru
      _
    %892 = vsyncpa [#allocation3], 1
    %893 = vsyncpa [#allocation6], 1
    %894 = vsyncpa [#allocation9], 1
    %895 = vsyncpa [#allocation4], 1

</llo_original>
